<compile_context>
chip_gen: v6e
topology: v6e:2x2x1
jax: 0.10.0
libtpu: 0.0.40
codegen_flags: <defaults>
</compile_context>

<pallas_src>
import functools
import math

import jax
import jax.numpy as jnp
from jax.experimental import pallas as pl
from jax.experimental.pallas import tpu as pltpu  # noqa: F401  (TPU backend)


# ---------------------------------------------------------------------------
# Fused Pallas kernel
# ---------------------------------------------------------------------------

def _fused_forward_kernel(*refs, n_feat, n_dr, n_pr, n_gcn,
                          feat_relu, dr_relu, pr_relu, gcn_relu):
    """Entire DenseGCNModel forward in one kernel invocation.

    refs = [feature, drEMB, prEMB, adj,
            (w,b)*n_feat, (w,b)*n_dr, (w,b)*n_pr, (w,b)*n_gcn,      # inputs
            xs_out, gcn_out_0, ..., gcn_out_{n_gcn-1}]              # outputs
    """
    it = iter(refs)
    feature_ref = next(it)
    dr_ref = next(it)
    pr_ref = next(it)
    adj_ref = next(it)

    def take_pairs(k):
        return [(next(it), next(it)) for _ in range(k)]

    feat_params = take_pairs(n_feat)
    dr_params = take_pairs(n_dr)
    pr_params = take_pairs(n_pr)
    gcn_params = take_pairs(n_gcn)

    out_refs = list(it)                  # [xs_ref, gcn_out_0, ...]
    xs_ref, gcn_out_refs = out_refs[0], out_refs[1:]

    def mlp(x, params, relu_idx):
        h = x
        for i, (w_ref, b_ref) in enumerate(params):
            h = jnp.dot(h, w_ref[...], preferred_element_type=jnp.float32) + b_ref[...]
            if i in relu_idx:
                h = jnp.maximum(h, 0.0)
            # TODO(synk): Dropout(0.1) after MLP layers is identity in eval mode.
        return h

    feat = mlp(feature_ref[...], feat_params, feat_relu)    # (N,  F_feat)
    drm = mlp(dr_ref[...], dr_params, dr_relu)               # (N1, F_emb)
    prm = mlp(pr_ref[...], pr_params, pr_relu)               # (N2, F_emb)

    # both_EMB = cat(dr_mlp, pr_mlp) along nodes (sublane-aligned concat, stays in vregs).
    both = jnp.concatenate([drm, prm], axis=0)               # (N, F_emb)
    emb_dim = both.shape[1]
    feat_dim = feat.shape[1]

    # xs = cat(both_EMB, feature_mlp) along features -- written straight into the
    # output slab (never re-read; first GCN matmul uses the split-weight identity).
    xs_ref[:, 0:emb_dim] = both.astype(xs_ref.dtype)
    xs_ref[:, emb_dim:emb_dim + feat_dim] = feat.astype(xs_ref.dtype)

    # Symmetric normalization D^{-1/2} A D^{-1/2}: adj loaded once, dinv computed once
    # and reused by every GCN layer. Matches PyG DenseGCNConv: row deg.clamp(min=1)**-0.5
    # applied on BOTH sides (the same row-degree vector scales rows and columns).
    adj = adj_ref[...]
    deg = jnp.sum(adj, axis=-1, keepdims=True)               # (N, 1)
    dinv = jax.lax.rsqrt(jnp.maximum(deg, 1.0))

    h = None
    for li, (w_ref, b_ref) in enumerate(gcn_params):
        w = w_ref[...]
        if li == 0:
            # xs @ W == both @ W[:emb_dim] + feat @ W[emb_dim:]
            xw = (jnp.dot(both, w[0:emb_dim, :], preferred_element_type=jnp.float32)
                  + jnp.dot(feat, w[emb_dim:emb_dim + feat_dim, :],
                            preferred_element_type=jnp.float32))
        else:
            xw = jnp.dot(h, w, preferred_element_type=jnp.float32)
        # D^{-1/2} A D^{-1/2} (X W) + b  ==  dinv * (A @ (dinv * XW)) + b
        out = dinv * jnp.dot(adj, dinv * xw, preferred_element_type=jnp.float32)
        out = out + b_ref[...]
        if li in gcn_relu:
            out = jnp.maximum(out, 0.0)
        # TODO(synk): Dropout(0.1) after each GCN layer is identity in eval mode.
        h = out
        gcn_out_refs[li][...] = out.astype(gcn_out_refs[li].dtype)


# ---------------------------------------------------------------------------
# Wrapper: one pallas_call for the whole forward
# ---------------------------------------------------------------------------

def dense_gcn_model_forward(feature, dr_emb, pr_emb, adj, params,
                            *, feat_relu=(0, 1), dr_relu=(0, 1), pr_relu=(0, 1)):
    n = adj.shape[0]
    feat_p = params["feature_mlp"]
    dr_p = params["mlp_dr"]
    pr_p = params["mlp_pr"]
    gcn_p = params["gcn"]
    gcn_relu = tuple(range(len(gcn_p)))      # relu_layers_index=range(num_layers)

    emb_dim = dr_p[-1][0].shape[1]
    feat_dim = feat_p[-1][0].shape[1]
    xs_dim = emb_dim + feat_dim
    gcn_out_dims = [w.shape[1] for (w, _) in gcn_p]

    flat_inputs = [feature, dr_emb, pr_emb, adj]
    for stack in (feat_p, dr_p, pr_p, gcn_p):
        for (w, b) in stack:
            flat_inputs += [w, b]

    out_shape = tuple(
        [jax.ShapeDtypeStruct((n, xs_dim), jnp.float32)]
        + [jax.ShapeDtypeStruct((n, d), jnp.float32) for d in gcn_out_dims]
    )

    # Advisory cost estimate so XLA schedules the fused custom call sensibly.
    flops = 0
    for rows, stack in ((feature.shape[0], feat_p),
                        (dr_emb.shape[0], dr_p),
                        (pr_emb.shape[0], pr_p)):
        for (w, _) in stack:
            flops += 2 * rows * w.shape[0] * w.shape[1]
    for (w, _) in gcn_p:
        flops += 2 * n * w.shape[0] * w.shape[1]     # X @ W
        flops += 2 * n * n * w.shape[1]              # (D^-1/2 A D^-1/2) @ XW
    bytes_accessed = 4 * (sum(int(x.size) for x in flat_inputs)
                          + sum(math.prod(s.shape) for s in out_shape))

    kernel = functools.partial(
        _fused_forward_kernel,
        n_feat=len(feat_p), n_dr=len(dr_p), n_pr=len(pr_p), n_gcn=len(gcn_p),
        feat_relu=feat_relu, dr_relu=dr_relu, pr_relu=pr_relu, gcn_relu=gcn_relu)

    outs = pl.pallas_call(
        kernel,
        out_shape=out_shape,
        cost_estimate=pl.CostEstimate(flops=flops, transcendentals=n,
                                      bytes_accessed=bytes_accessed),
    )(*flat_inputs)

    # embeddings list: [xs, gcn_layer_1_out, gcn_layer_2_out, ...]
    return list(outs)


# ---------------------------------------------------------------------------
# Parameter init (deterministic, glorot weights / zero bias)
# ---------------------------------------------------------------------------

def _glorot(key, shape):
    fan_in, fan_out = shape
    limit = (6.0 / (fan_in + fan_out)) ** 0.5
    return jax.random.uniform(key, shape, jnp.float32, -limit, limit)


def init_stack(key, dims):
    params = []
    for i in range(len(dims) - 1):
        key, k = jax.random.split(key)
        w = _glorot(k, (dims[i], dims[i + 1]))
        b = jnp.zeros((1, dims[i + 1]), jnp.float32)
        params.append((w, b))
    return params


# ---------------------------------------------------------------------------
# Main
# ---------------------------------------------------------------------------

if __name__ == "__main__":
    key = jax.random.PRNGKey(0)
    k_feat, k_dr, k_pr, k_adj, k_p1, k_p2, k_p3, k_p4 = jax.random.split(key, 8)

    num_node1s, num_node2s = 8, 8
    n_nodes = num_node1s + num_node2s          # 16

    feature_mlp_dims = [16, 32, 16]
    dr_mlp_dims = [24, 32, 16]
    pr_mlp_dims = [24, 32, 16]
    gcn_dim = [32, 32, 16]                     # gcn_dim[0] = emb(16) + feat(16)

    feature = jax.random.normal(k_feat, (n_nodes, feature_mlp_dims[0]), jnp.float32)
    dr_emb = jax.random.normal(k_dr, (num_node1s, dr_mlp_dims[0]), jnp.float32)
    pr_emb = jax.random.normal(k_pr, (num_node2s, pr_mlp_dims[0]), jnp.float32)

    # symmetric adjacency; GCN normalizes by row degree. add_loop=False -> no self loops.
    adj_raw = (jax.random.uniform(k_adj, (n_nodes, n_nodes)) > 0.6).astype(jnp.float32)
    adj = jnp.maximum(adj_raw, adj_raw.T)
    adj = adj * (1.0 - jnp.eye(n_nodes, dtype=jnp.float32))

    # TODO(synk): training-mode dropout_adj (stochastic, force_undirected) not implemented;
    # eval / p=0 it is the identity on adj, which is what is modelled here.
    params = {
        "feature_mlp": init_stack(k_p1, feature_mlp_dims),
        "mlp_dr": init_stack(k_p2, dr_mlp_dims),
        "mlp_pr": init_stack(k_p3, pr_mlp_dims),
        "gcn": init_stack(k_p4, gcn_dim),
    }

    embeddings = dense_gcn_model_forward(feature, dr_emb, pr_emb, adj, params)
    for e in embeddings:
        jax.block_until_ready(e)

    assert embeddings[0].shape == (n_nodes, gcn_dim[0])
    assert embeddings[1].shape == (n_nodes, gcn_dim[1])
    assert embeddings[2].shape == (n_nodes, gcn_dim[2])
    print("KERNEL_OK")
</pallas_src>

<mosaic_0001>
module attributes {stable_mosaic.version = 11 : i64} {
  func.func @_fused_forward_kernel(%arg0: memref<16x16xf32, #tpu.memory_space<vmem>>, %arg1: memref<8x24xf32, #tpu.memory_space<vmem>>, %arg2: memref<8x24xf32, #tpu.memory_space<vmem>>, %arg3: memref<16x16xf32, #tpu.memory_space<vmem>>, %arg4: memref<16x32xf32, #tpu.memory_space<vmem>>, %arg5: memref<1x32xf32, #tpu.memory_space<vmem>>, %arg6: memref<32x16xf32, #tpu.memory_space<vmem>>, %arg7: memref<1x16xf32, #tpu.memory_space<vmem>>, %arg8: memref<24x32xf32, #tpu.memory_space<vmem>>, %arg9: memref<1x32xf32, #tpu.memory_space<vmem>>, %arg10: memref<32x16xf32, #tpu.memory_space<vmem>>, %arg11: memref<1x16xf32, #tpu.memory_space<vmem>>, %arg12: memref<24x32xf32, #tpu.memory_space<vmem>>, %arg13: memref<1x32xf32, #tpu.memory_space<vmem>>, %arg14: memref<32x16xf32, #tpu.memory_space<vmem>>, %arg15: memref<1x16xf32, #tpu.memory_space<vmem>>, %arg16: memref<32x32xf32, #tpu.memory_space<vmem>>, %arg17: memref<1x32xf32, #tpu.memory_space<vmem>>, %arg18: memref<32x16xf32, #tpu.memory_space<vmem>>, %arg19: memref<1x16xf32, #tpu.memory_space<vmem>>, %arg20: memref<16x32xf32, #tpu.memory_space<vmem>>, %arg21: memref<16x32xf32, #tpu.memory_space<vmem>>, %arg22: memref<16x16xf32, #tpu.memory_space<vmem>>) attributes {dimension_semantics = [], scalar_prefetch = 0 : i64, scratch_operands = 0 : i64, tpu.core_type = #tpu.core_type<tc>} {
    %c0 = arith.constant 0 : index
    %c0_0 = arith.constant 0 : index
    %0 = vector.load %arg0[%c0, %c0_0] : memref<16x16xf32, #tpu.memory_space<vmem>>, vector<16x16xf32>
    %c0_1 = arith.constant 0 : index
    %c0_2 = arith.constant 0 : index
    %1 = vector.load %arg4[%c0_1, %c0_2] : memref<16x32xf32, #tpu.memory_space<vmem>>, vector<16x32xf32>
    %cst = arith.constant dense<0.000000e+00> : vector<16x32xf32>
    %2 = tpu.matmul %0, %1, %cst {dimension_numbers = #tpu.dot_dimension_numbers<[1], [0], [0], [1], [0, 0, 1, 1], [], []>} : vector<16x16xf32>, vector<16x32xf32>, vector<16x32xf32> -> vector<16x32xf32>
    %c0_3 = arith.constant 0 : index
    %c0_4 = arith.constant 0 : index
    %3 = vector.load %arg5[%c0_3, %c0_4] : memref<1x32xf32, #tpu.memory_space<vmem>>, vector<1x32xf32>
    %4 = vector.broadcast %3 : vector<1x32xf32> to vector<16x32xf32>
    %5 = arith.addf %2, %4 : vector<16x32xf32>
    %cst_5 = arith.constant 0.000000e+00 : f32
    %6 = vector.broadcast %cst_5 : f32 to vector<16x32xf32>
    %7 = arith.maximumf %5, %6 : vector<16x32xf32>
    %c0_6 = arith.constant 0 : index
    %c0_7 = arith.constant 0 : index
    %8 = vector.load %arg6[%c0_6, %c0_7] : memref<32x16xf32, #tpu.memory_space<vmem>>, vector<32x16xf32>
    %cst_8 = arith.constant dense<0.000000e+00> : vector<16x16xf32>
    %9 = tpu.matmul %7, %8, %cst_8 {dimension_numbers = #tpu.dot_dimension_numbers<[1], [0], [0], [1], [0, 0, 1, 1], [], []>} : vector<16x32xf32>, vector<32x16xf32>, vector<16x16xf32> -> vector<16x16xf32>
    %c0_9 = arith.constant 0 : index
    %c0_10 = arith.constant 0 : index
    %10 = vector.load %arg7[%c0_9, %c0_10] : memref<1x16xf32, #tpu.memory_space<vmem>>, vector<1x16xf32>
    %11 = vector.broadcast %10 : vector<1x16xf32> to vector<16x16xf32>
    %12 = arith.addf %9, %11 : vector<16x16xf32>
    %cst_11 = arith.constant 0.000000e+00 : f32
    %13 = vector.broadcast %cst_11 : f32 to vector<16x16xf32>
    %14 = arith.maximumf %12, %13 : vector<16x16xf32>
    %c0_12 = arith.constant 0 : index
    %c0_13 = arith.constant 0 : index
    %15 = vector.load %arg1[%c0_12, %c0_13] : memref<8x24xf32, #tpu.memory_space<vmem>>, vector<8x24xf32>
    %c0_14 = arith.constant 0 : index
    %c0_15 = arith.constant 0 : index
    %16 = vector.load %arg8[%c0_14, %c0_15] : memref<24x32xf32, #tpu.memory_space<vmem>>, vector<24x32xf32>
    %cst_16 = arith.constant dense<0.000000e+00> : vector<8x32xf32>
    %17 = tpu.matmul %15, %16, %cst_16 {dimension_numbers = #tpu.dot_dimension_numbers<[1], [0], [0], [1], [0, 0, 1, 1], [], []>} : vector<8x24xf32>, vector<24x32xf32>, vector<8x32xf32> -> vector<8x32xf32>
    %c0_17 = arith.constant 0 : index
    %c0_18 = arith.constant 0 : index
    %18 = vector.load %arg9[%c0_17, %c0_18] : memref<1x32xf32, #tpu.memory_space<vmem>>, vector<1x32xf32>
    %19 = vector.broadcast %18 : vector<1x32xf32> to vector<8x32xf32>
    %20 = arith.addf %17, %19 : vector<8x32xf32>
    %cst_19 = arith.constant 0.000000e+00 : f32
    %21 = vector.broadcast %cst_19 : f32 to vector<8x32xf32>
    %22 = arith.maximumf %20, %21 : vector<8x32xf32>
    %c0_20 = arith.constant 0 : index
    %c0_21 = arith.constant 0 : index
    %23 = vector.load %arg10[%c0_20, %c0_21] : memref<32x16xf32, #tpu.memory_space<vmem>>, vector<32x16xf32>
    %cst_22 = arith.constant dense<0.000000e+00> : vector<8x16xf32>
    %24 = tpu.matmul %22, %23, %cst_22 {dimension_numbers = #tpu.dot_dimension_numbers<[1], [0], [0], [1], [0, 0, 1, 1], [], []>} : vector<8x32xf32>, vector<32x16xf32>, vector<8x16xf32> -> vector<8x16xf32>
    %c0_23 = arith.constant 0 : index
    %c0_24 = arith.constant 0 : index
    %25 = vector.load %arg11[%c0_23, %c0_24] : memref<1x16xf32, #tpu.memory_space<vmem>>, vector<1x16xf32>
    %26 = vector.broadcast %25 : vector<1x16xf32> to vector<8x16xf32>
    %27 = arith.addf %24, %26 : vector<8x16xf32>
    %cst_25 = arith.constant 0.000000e+00 : f32
    %28 = vector.broadcast %cst_25 : f32 to vector<8x16xf32>
    %29 = arith.maximumf %27, %28 : vector<8x16xf32>
    %c0_26 = arith.constant 0 : index
    %c0_27 = arith.constant 0 : index
    %30 = vector.load %arg2[%c0_26, %c0_27] : memref<8x24xf32, #tpu.memory_space<vmem>>, vector<8x24xf32>
    %c0_28 = arith.constant 0 : index
    %c0_29 = arith.constant 0 : index
    %31 = vector.load %arg12[%c0_28, %c0_29] : memref<24x32xf32, #tpu.memory_space<vmem>>, vector<24x32xf32>
    %cst_30 = arith.constant dense<0.000000e+00> : vector<8x32xf32>
    %32 = tpu.matmul %30, %31, %cst_30 {dimension_numbers = #tpu.dot_dimension_numbers<[1], [0], [0], [1], [0, 0, 1, 1], [], []>} : vector<8x24xf32>, vector<24x32xf32>, vector<8x32xf32> -> vector<8x32xf32>
    %c0_31 = arith.constant 0 : index
    %c0_32 = arith.constant 0 : index
    %33 = vector.load %arg13[%c0_31, %c0_32] : memref<1x32xf32, #tpu.memory_space<vmem>>, vector<1x32xf32>
    %34 = vector.broadcast %33 : vector<1x32xf32> to vector<8x32xf32>
    %35 = arith.addf %32, %34 : vector<8x32xf32>
    %cst_33 = arith.constant 0.000000e+00 : f32
    %36 = vector.broadcast %cst_33 : f32 to vector<8x32xf32>
    %37 = arith.maximumf %35, %36 : vector<8x32xf32>
    %c0_34 = arith.constant 0 : index
    %c0_35 = arith.constant 0 : index
    %38 = vector.load %arg14[%c0_34, %c0_35] : memref<32x16xf32, #tpu.memory_space<vmem>>, vector<32x16xf32>
    %cst_36 = arith.constant dense<0.000000e+00> : vector<8x16xf32>
    %39 = tpu.matmul %37, %38, %cst_36 {dimension_numbers = #tpu.dot_dimension_numbers<[1], [0], [0], [1], [0, 0, 1, 1], [], []>} : vector<8x32xf32>, vector<32x16xf32>, vector<8x16xf32> -> vector<8x16xf32>
    %c0_37 = arith.constant 0 : index
    %c0_38 = arith.constant 0 : index
    %40 = vector.load %arg15[%c0_37, %c0_38] : memref<1x16xf32, #tpu.memory_space<vmem>>, vector<1x16xf32>
    %41 = vector.broadcast %40 : vector<1x16xf32> to vector<8x16xf32>
    %42 = arith.addf %39, %41 : vector<8x16xf32>
    %cst_39 = arith.constant 0.000000e+00 : f32
    %43 = vector.broadcast %cst_39 : f32 to vector<8x16xf32>
    %44 = arith.maximumf %42, %43 : vector<8x16xf32>
    %45 = tpu.concatenate %29, %44 in 0 : vector<8x16xf32>, vector<8x16xf32> -> vector<16x16xf32>
    %c0_40 = arith.constant 0 : index
    %c0_41 = arith.constant 0 : index
    %46 = vector.load %arg20[%c0_40, %c0_41] : memref<16x32xf32, #tpu.memory_space<vmem>>, vector<16x16xf32>
    tpu.vector_store %arg20[%c0_40, %c0_41], %45 {strides = array<i32>} : memref<16x32xf32, #tpu.memory_space<vmem>>, vector<16x16xf32>,
    %c0_42 = arith.constant 0 : index
    %c16 = arith.constant 16 : index
    %47 = vector.load %arg20[%c0_42, %c16] : memref<16x32xf32, #tpu.memory_space<vmem>>, vector<16x16xf32>
    tpu.vector_store %arg20[%c0_42, %c16], %14 {strides = array<i32>} : memref<16x32xf32, #tpu.memory_space<vmem>>, vector<16x16xf32>,
    %c0_43 = arith.constant 0 : index
    %c0_44 = arith.constant 0 : index
    %48 = vector.load %arg3[%c0_43, %c0_44] : memref<16x16xf32, #tpu.memory_space<vmem>>, vector<16x16xf32>
    %cst_45 = arith.constant dense<0.000000e+00> : vector<16xf32>
    %49 = vector.multi_reduction <add>, %48, %cst_45 [1] : vector<16x16xf32> to vector<16xf32>
    %50 = vector.shape_cast %49 : vector<16xf32> to vector<16x1xf32>
    %cst_46 = arith.constant 1.000000e+00 : f32
    %51 = vector.broadcast %cst_46 : f32 to vector<16x1xf32>
    %52 = arith.maximumf %50, %51 : vector<16x1xf32>
    %53 = math.rsqrt %52 : vector<16x1xf32>
    %c0_47 = arith.constant 0 : index
    %c0_48 = arith.constant 0 : index
    %54 = vector.load %arg16[%c0_47, %c0_48] : memref<32x32xf32, #tpu.memory_space<vmem>>, vector<32x32xf32>
    %55 = vector.extract_strided_slice %54 {offsets = [0, 0], sizes = [16, 32], strides = [1, 1]} : vector<32x32xf32> to vector<16x32xf32>
    %cst_49 = arith.constant dense<0.000000e+00> : vector<16x32xf32>
    %56 = tpu.matmul %45, %55, %cst_49 {dimension_numbers = #tpu.dot_dimension_numbers<[1], [0], [0], [1], [0, 0, 1, 1], [], []>} : vector<16x16xf32>, vector<16x32xf32>, vector<16x32xf32> -> vector<16x32xf32>
    %57 = vector.extract_strided_slice %54 {offsets = [16, 0], sizes = [16, 32], strides = [1, 1]} : vector<32x32xf32> to vector<16x32xf32>
    %cst_50 = arith.constant dense<0.000000e+00> : vector<16x32xf32>
    %58 = tpu.matmul %14, %57, %cst_50 {dimension_numbers = #tpu.dot_dimension_numbers<[1], [0], [0], [1], [0, 0, 1, 1], [], []>} : vector<16x16xf32>, vector<16x32xf32>, vector<16x32xf32> -> vector<16x32xf32>
    %59 = arith.addf %56, %58 : vector<16x32xf32>
    %60 = vector.broadcast %53 : vector<16x1xf32> to vector<16x32xf32>
    %61 = arith.mulf %60, %59 : vector<16x32xf32>
    %cst_51 = arith.constant dense<0.000000e+00> : vector<16x32xf32>
    %62 = tpu.matmul %48, %61, %cst_51 {dimension_numbers = #tpu.dot_dimension_numbers<[1], [0], [0], [1], [0, 0, 1, 1], [], []>} : vector<16x16xf32>, vector<16x32xf32>, vector<16x32xf32> -> vector<16x32xf32>
    %63 = vector.broadcast %53 : vector<16x1xf32> to vector<16x32xf32>
    %64 = arith.mulf %63, %62 : vector<16x32xf32>
    %c0_52 = arith.constant 0 : index
    %c0_53 = arith.constant 0 : index
    %65 = vector.load %arg17[%c0_52, %c0_53] : memref<1x32xf32, #tpu.memory_space<vmem>>, vector<1x32xf32>
    %66 = vector.broadcast %65 : vector<1x32xf32> to vector<16x32xf32>
    %67 = arith.addf %64, %66 : vector<16x32xf32>
    %cst_54 = arith.constant 0.000000e+00 : f32
    %68 = vector.broadcast %cst_54 : f32 to vector<16x32xf32>
    %69 = arith.maximumf %67, %68 : vector<16x32xf32>
    %c0_55 = arith.constant 0 : index
    %c0_56 = arith.constant 0 : index
    %70 = vector.load %arg21[%c0_55, %c0_56] : memref<16x32xf32, #tpu.memory_space<vmem>>, vector<16x32xf32>
    tpu.vector_store %arg21[%c0_55, %c0_56], %69 {strides = array<i32>} : memref<16x32xf32, #tpu.memory_space<vmem>>, vector<16x32xf32>,
    %c0_57 = arith.constant 0 : index
    %c0_58 = arith.constant 0 : index
    %71 = vector.load %arg18[%c0_57, %c0_58] : memref<32x16xf32, #tpu.memory_space<vmem>>, vector<32x16xf32>
    %cst_59 = arith.constant dense<0.000000e+00> : vector<16x16xf32>
    %72 = tpu.matmul %69, %71, %cst_59 {dimension_numbers = #tpu.dot_dimension_numbers<[1], [0], [0], [1], [0, 0, 1, 1], [], []>} : vector<16x32xf32>, vector<32x16xf32>, vector<16x16xf32> -> vector<16x16xf32>
    %73 = vector.broadcast %53 : vector<16x1xf32> to vector<16x16xf32>
    %74 = arith.mulf %73, %72 : vector<16x16xf32>
    %cst_60 = arith.constant dense<0.000000e+00> : vector<16x16xf32>
    %75 = tpu.matmul %48, %74, %cst_60 {dimension_numbers = #tpu.dot_dimension_numbers<[1], [0], [0], [1], [0, 0, 1, 1], [], []>} : vector<16x16xf32>, vector<16x16xf32>, vector<16x16xf32> -> vector<16x16xf32>
    %76 = vector.broadcast %53 : vector<16x1xf32> to vector<16x16xf32>
    %77 = arith.mulf %76, %75 : vector<16x16xf32>
    %c0_61 = arith.constant 0 : index
    %c0_62 = arith.constant 0 : index
    %78 = vector.load %arg19[%c0_61, %c0_62] : memref<1x16xf32, #tpu.memory_space<vmem>>, vector<1x16xf32>
    %79 = vector.broadcast %78 : vector<1x16xf32> to vector<16x16xf32>
    %80 = arith.addf %77, %79 : vector<16x16xf32>
    %cst_63 = arith.constant 0.000000e+00 : f32
    %81 = vector.broadcast %cst_63 : f32 to vector<16x16xf32>
    %82 = arith.maximumf %80, %81 : vector<16x16xf32>
    %c0_64 = arith.constant 0 : index
    %c0_65 = arith.constant 0 : index
    %83 = vector.load %arg22[%c0_64, %c0_65] : memref<16x16xf32, #tpu.memory_space<vmem>>, vector<16x16xf32>
    tpu.vector_store %arg22[%c0_64, %c0_65], %82 {strides = array<i32>} : memref<16x16xf32, #tpu.memory_space<vmem>>, vector<16x16xf32>,
    return
  }
}

</mosaic_0001>

<llo_original>
// kernel: tpu_custom_call.1
$region0: #{tpu_custom_call.1}
  #allocation0 [shape = 'u32[]', space=smem, size = 0x4, offset = 0x4, fixed_abs, tag = 'smem constant byte address 0x4 - core index']
  #allocation1 [shape = 'u32[144,128]{1,0:T(1,128)}', space=vmem, size = 0x12000, scoped, tag = 'internal scratch']
  %s0 = inlined_call_operand.vmem [shape: f32[16,16], index: 0, kind: input, shape index: {}]
  %s1 = inlined_call_operand.vmem [shape: f32[8,24], index: 1, kind: input, shape index: {}]
  %s2 = inlined_call_operand.vmem [shape: f32[8,24], index: 2, kind: input, shape index: {}]
  %s3 = inlined_call_operand.vmem [shape: f32[16,16], index: 3, kind: input, shape index: {}]
  %s4 = inlined_call_operand.vmem [shape: f32[16,32], index: 4, kind: input, shape index: {}]
  %s5 = inlined_call_operand.vmem [shape: f32[1,32], index: 5, kind: input, shape index: {}]
  %s6 = inlined_call_operand.vmem [shape: f32[32,16], index: 6, kind: input, shape index: {}]
  %s7 = inlined_call_operand.vmem [shape: f32[1,16], index: 7, kind: input, shape index: {}]
  %s8 = inlined_call_operand.vmem [shape: f32[24,32], index: 8, kind: input, shape index: {}]
  %s9 = inlined_call_operand.vmem [shape: f32[1,32], index: 9, kind: input, shape index: {}]
  %s10 = inlined_call_operand.vmem [shape: f32[32,16], index: 10, kind: input, shape index: {}]
  %s11 = inlined_call_operand.vmem [shape: f32[1,16], index: 11, kind: input, shape index: {}]
  %s12 = inlined_call_operand.vmem [shape: f32[24,32], index: 12, kind: input, shape index: {}]
  %s13 = inlined_call_operand.vmem [shape: f32[1,32], index: 13, kind: input, shape index: {}]
  %s14 = inlined_call_operand.vmem [shape: f32[32,16], index: 14, kind: input, shape index: {}]
  %s15 = inlined_call_operand.vmem [shape: f32[1,16], index: 15, kind: input, shape index: {}]
  %s16 = inlined_call_operand.vmem [shape: f32[32,32], index: 16, kind: input, shape index: {}]
  %s17 = inlined_call_operand.vmem [shape: f32[1,32], index: 17, kind: input, shape index: {}]
  %s18 = inlined_call_operand.vmem [shape: f32[32,16], index: 18, kind: input, shape index: {}]
  %s19 = inlined_call_operand.vmem [shape: f32[1,16], index: 19, kind: input, shape index: {}]
  %s20 = inlined_call_operand.hbm [shape: f32[16,32], index: 20, kind: output, shape index: {0}]
  %s21 = inlined_call_operand.hbm [shape: f32[16,32], index: 21, kind: output, shape index: {1}]
  %s22 = inlined_call_operand.hbm [shape: f32[16,16], index: 22, kind: output, shape index: {2}]
  %23 = xla_tuple %s20, %s21, %s22
  %s24 = sld [smem:[#allocation0]]
  $region106: #{tpu_custom_call.1} parent=0
    _
  %s26 = ssub.s32 1, %s24
  %s27 = scalar_select 0, %s26, %s24
  $region1: #{tpu_custom_call.1} parent=0
    #allocation2 [shape = 'u8[8192]{0}', space=vmem, size = 0x2000, scoped, tag = 'output window, operand 0, single buffered']
    #allocation3 [shape = 's32[1]{0}', space=sflag, size = 0x4, scoped, tag = 'scoped memory for tpu_custom_call.1']
    #allocation4 [shape = 'u8[8192]{0}', space=vmem, size = 0x2000, scoped, tag = 'output window, operand 1, single buffered']
    #allocation5 [shape = 's32[1]{0}', space=sflag, size = 0x4, scoped, tag = 'scoped memory for tpu_custom_call.1']
    #allocation6 [shape = 'u8[8192]{0}', space=vmem, size = 0x2000, scoped, tag = 'output window, operand 2, single buffered']
    %28 = vsyncpa [#allocation3], 0
    %29 = vsyncpa [#allocation5], 0
    // Predicated region
    $region2: #{tpu_custom_call.1} parent=1 // pred_check
      _
    $region3: #{tpu_custom_call.1} parent=1 // pred_check_branch
      %31 = sbr.rel (0) target = $region5
    $region4: #{tpu_custom_call.1} parent=1 // pred_region
      _
    $region5: #{tpu_custom_call.1} parent=1 // pred_fallthru
      _
    // Predicated region
    $region6: #{tpu_custom_call.1} parent=1 // pred_check
      _
    $region7: #{tpu_custom_call.1} parent=1 // pred_check_branch
      %33 = sbr.rel (0) target = $region9
    $region8: #{tpu_custom_call.1} parent=1 // pred_region
      _
    $region9: #{tpu_custom_call.1} parent=1 // pred_fallthru
      _
    // Predicated region
    $region10: #{tpu_custom_call.1} parent=1 // pred_check
      _
    $region11: #{tpu_custom_call.1} parent=1 // pred_check_branch
      %35 = sbr.rel (0) target = $region13
    $region12: #{tpu_custom_call.1} parent=1 // pred_region
      _
    $region13: #{tpu_custom_call.1} parent=1 // pred_fallthru
      _
    // Predicated region
    $region14: #{tpu_custom_call.1} parent=1 // pred_check
      _
    $region15: #{tpu_custom_call.1} parent=1 // pred_check_branch
      %37 = sbr.rel (0) target = $region17
    $region16: #{tpu_custom_call.1} parent=1 // pred_region
      _
    $region17: #{tpu_custom_call.1} parent=1 // pred_fallthru
      _
    // Predicated region
    $region18: #{tpu_custom_call.1} parent=1 // pred_check
      _
    $region19: #{tpu_custom_call.1} parent=1 // pred_check_branch
      %39 = sbr.rel (0) target = $region21
    $region20: #{tpu_custom_call.1} parent=1 // pred_region
      _
    $region21: #{tpu_custom_call.1} parent=1 // pred_fallthru
      _
    // Predicated region
    $region22: #{tpu_custom_call.1} parent=1 // pred_check
      _
    $region23: #{tpu_custom_call.1} parent=1 // pred_check_branch
      %41 = sbr.rel (0) target = $region25
    $region24: #{tpu_custom_call.1} parent=1 // pred_region
      _
    $region25: #{tpu_custom_call.1} parent=1 // pred_fallthru
      _
    // Predicated region
    $region26: #{tpu_custom_call.1} parent=1 // pred_check
      _
    $region27: #{tpu_custom_call.1} parent=1 // pred_check_branch
      %43 = sbr.rel (0) target = $region29
    $region28: #{tpu_custom_call.1} parent=1 // pred_region
      _
    $region29: #{tpu_custom_call.1} parent=1 // pred_fallthru
      _
    // Predicated region
    $region30: #{tpu_custom_call.1} parent=1 // pred_check
      _
    $region31: #{tpu_custom_call.1} parent=1 // pred_check_branch
      %45 = sbr.rel (0) target = $region33
    $region32: #{tpu_custom_call.1} parent=1 // pred_region
      _
    $region33: #{tpu_custom_call.1} parent=1 // pred_fallthru
      _
    // Predicated region
    $region34: #{tpu_custom_call.1} parent=1 // pred_check
      _
    $region35: #{tpu_custom_call.1} parent=1 // pred_check_branch
      %47 = sbr.rel (0) target = $region37
    $region36: #{tpu_custom_call.1} parent=1 // pred_region
      _
    $region37: #{tpu_custom_call.1} parent=1 // pred_fallthru
      _
    // Predicated region
    $region38: #{tpu_custom_call.1} parent=1 // pred_check
      _
    $region39: #{tpu_custom_call.1} parent=1 // pred_check_branch
      %49 = sbr.rel (0) target = $region41
    $region40: #{tpu_custom_call.1} parent=1 // pred_region
      _
    $region41: #{tpu_custom_call.1} parent=1 // pred_fallthru
      _
    // Predicated region
    $region42: #{tpu_custom_call.1} parent=1 // pred_check
      _
    $region43: #{tpu_custom_call.1} parent=1 // pred_check_branch
      %51 = sbr.rel (0) target = $region45
    $region44: #{tpu_custom_call.1} parent=1 // pred_region
      _
    $region45: #{tpu_custom_call.1} parent=1 // pred_fallthru
      _
    // Predicated region
    $region46: #{tpu_custom_call.1} parent=1 // pred_check
      _
    $region47: #{tpu_custom_call.1} parent=1 // pred_check_branch
      %53 = sbr.rel (0) target = $region49
    $region48: #{tpu_custom_call.1} parent=1 // pred_region
      _
    $region49: #{tpu_custom_call.1} parent=1 // pred_fallthru
      _
    // Predicated region
    $region50: #{tpu_custom_call.1} parent=1 // pred_check
      _
    $region51: #{tpu_custom_call.1} parent=1 // pred_check_branch
      %55 = sbr.rel (0) target = $region53
    $region52: #{tpu_custom_call.1} parent=1 // pred_region
      _
    $region53: #{tpu_custom_call.1} parent=1 // pred_fallthru
      _
    // Predicated region
    $region54: #{tpu_custom_call.1} parent=1 // pred_check
      _
    $region55: #{tpu_custom_call.1} parent=1 // pred_check_branch
      %57 = sbr.rel (0) target = $region57
    $region56: #{tpu_custom_call.1} parent=1 // pred_region
      _
    $region57: #{tpu_custom_call.1} parent=1 // pred_fallthru
      _
    // Predicated region
    $region58: #{tpu_custom_call.1} parent=1 // pred_check
      _
    $region59: #{tpu_custom_call.1} parent=1 // pred_check_branch
      %59 = sbr.rel (0) target = $region61
    $region60: #{tpu_custom_call.1} parent=1 // pred_region
      _
    $region61: #{tpu_custom_call.1} parent=1 // pred_fallthru
      _
    // Predicated region
    $region62: #{tpu_custom_call.1} parent=1 // pred_check
      _
    $region63: #{tpu_custom_call.1} parent=1 // pred_check_branch
      %61 = sbr.rel (0) target = $region65
    $region64: #{tpu_custom_call.1} parent=1 // pred_region
      _
    $region65: #{tpu_custom_call.1} parent=1 // pred_fallthru
      _
    // Predicated region
    $region66: #{tpu_custom_call.1} parent=1 // pred_check
      _
    $region67: #{tpu_custom_call.1} parent=1 // pred_check_branch
      %63 = sbr.rel (0) target = $region69
    $region68: #{tpu_custom_call.1} parent=1 // pred_region
      _
    $region69: #{tpu_custom_call.1} parent=1 // pred_fallthru
      _
    // Predicated region
    $region70: #{tpu_custom_call.1} parent=1 // pred_check
      _
    $region71: #{tpu_custom_call.1} parent=1 // pred_check_branch
      %65 = sbr.rel (0) target = $region73
    $region72: #{tpu_custom_call.1} parent=1 // pred_region
      _
    $region73: #{tpu_custom_call.1} parent=1 // pred_fallthru
      _
    // Predicated region
    $region74: #{tpu_custom_call.1} parent=1 // pred_check
      _
    $region75: #{tpu_custom_call.1} parent=1 // pred_check_branch
      %67 = sbr.rel (0) target = $region77
    $region76: #{tpu_custom_call.1} parent=1 // pred_region
      _
    $region77: #{tpu_custom_call.1} parent=1 // pred_fallthru
      _
    // Predicated region
    $region78: #{tpu_custom_call.1} parent=1 // pred_check
      _
    $region79: #{tpu_custom_call.1} parent=1 // pred_check_branch
      %69 = sbr.rel (0) target = $region81
    $region80: #{tpu_custom_call.1} parent=1 // pred_region
      _
    $region81: #{tpu_custom_call.1} parent=1 // pred_fallthru
      _
    %v70 = vld [vmem:[%s0] sm:$0xff]
    %v71 = vld [vmem:[%s0 + $0x8] sm:$0xff]
    %v72 = vld [vmem:[%s4] sm:$0xff]
    %v73 = vld [vmem:[%s4 + $0x8] sm:$0xff]
    %v74 = vld [vmem:[%s5] sm:$0x1]
    %v76 = vlaneseq
    %v77 = vshrl.u32 %v76, 7
    %v78 = vsub.s32 0, %v77
    %v79 = vrot.slane %v74, %v78
    %vm81 = vcmask 130048
    %v83 = vsel %vm81, %v70, 0
    %v86 = vsel %vm81, %v71, 0
    %88 = vmatprep.subr.mxu0 0.0
    %89 = vmatpush1.msra.mxu0 0.0
    %90 = vmatprep.subr.mxu0 0.0
    %91 = vmatpush1.msra.mxu0 0.0
    %92 = vmatprep.subr.mxu0 0.0
    %93 = vmatpush1.msra.mxu0 0.0
    %94 = vmatprep.subr.mxu0 0.0
    %95 = vmatpush1.msra.mxu0 0.0
    %96 = vmatprep.subr.mxu0 0.0
    %97 = vmatpush1.msra.mxu0 0.0
    %98 = vmatprep.subr.mxu0 0.0
    %99 = vmatpush1.msra.mxu0 0.0
    %100 = vmatprep.subr.mxu0 0.0
    %101 = vmatpush1.msra.mxu0 0.0
    %102 = vmatprep.subr.mxu0 0.0
    %103 = vmatpush1.msra.mxu0 0.0
    %104 = vmatprep.subr.mxu0 0.0
    %105 = vmatpush1.msra.mxu0 0.0
    %106 = vmatprep.subr.mxu0 0.0
    %107 = vmatpush1.msra.mxu0 0.0
    %108 = vmatprep.subr.mxu0 0.0
    %109 = vmatpush1.msra.mxu0 0.0
    %110 = vmatprep.subr.mxu0 0.0
    %111 = vmatpush1.msra.mxu0 0.0
    %112 = vmatprep.subr.mxu0 0.0
    %113 = vmatpush1.msra.mxu0 0.0
    %114 = vmatprep.subr.mxu0 0.0
    %115 = vmatpush1.msra.mxu0 0.0
    %116 = vmatprep.subr.mxu0 0.0
    %117 = vmatpush1.msra.mxu0 %v73
    %118 = vmatprep.subr.mxu0 0.0
    %119 = vmatpush1.msra.mxu0 %v72
    %120 = vmatprep.subr.mxu0 0.0
    %121 = vmatpush2.msra.mxu0 0.0
    %122 = vmatprep.subr.mxu0 0.0
    %123 = vmatpush2.msra.mxu0 0.0
    %124 = vmatprep.subr.mxu0 0.0
    %125 = vmatpush2.msra.mxu0 0.0
    %126 = vmatprep.subr.mxu0 0.0
    %127 = vmatpush2.msra.mxu0 0.0
    %128 = vmatprep.subr.mxu0 0.0
    %129 = vmatpush2.msra.mxu0 0.0
    %130 = vmatprep.subr.mxu0 0.0
    %131 = vmatpush2.msra.mxu0 0.0
    %132 = vmatprep.subr.mxu0 0.0
    %133 = vmatpush2.msra.mxu0 0.0
    %134 = vmatprep.subr.mxu0 0.0
    %135 = vmatpush2.msra.mxu0 0.0
    %136 = vmatprep.subr.mxu0 0.0
    %137 = vmatpush2.msra.mxu0 0.0
    %138 = vmatprep.subr.mxu0 0.0
    %139 = vmatpush2.msra.mxu0 0.0
    %140 = vmatprep.subr.mxu0 0.0
    %141 = vmatpush2.msra.mxu0 0.0
    %142 = vmatprep.subr.mxu0 0.0
    %143 = vmatpush2.msra.mxu0 0.0
    %144 = vmatprep.subr.mxu0 0.0
    %145 = vmatpush2.msra.mxu0 0.0
    %146 = vmatprep.subr.mxu0 0.0
    %147 = vmatpush2.msra.mxu0 0.0
    %148 = vmatprep.subr.mxu0 0.0
    %149 = vmatpush2.msra.mxu0 0.0
    %150 = vmatprep.subr.mxu0 0.0
    %151 = vmatpush2.msra.mxu0 0.0
    %152 = vmatprep.mubr.f32.mxu0 0.0
    %153 = vmatmul.mubr.f32.gmra.mxu0 %v83
    %v154 = vpop.f32.mrf.mxu0
    %v155 = vadd.f32 %v79, %v154
    %v156 = vpop.f32.mrf.mxu0
    %157 = vmatprep.mubr.f32.mxu0 0.0
    %158 = vmatmul.mubr.f32.gmra.mxu0 %v86
    %v159 = vpop.f32.mrf.mxu0
    %v160 = vadd.f32 %v79, %v159
    %v161 = vpop.f32.mrf.mxu0
    %162 = vdwg.mxu0
    %v163 = vmax.f32 %v155, 0.0
    %v164 = vmax.f32 %v160, 0.0
    %v165 = vld [vmem:[%s6] sm:$0xff]
    %v166 = vld [vmem:[%s6 + $0x8] sm:$0xff]
    %v167 = vld [vmem:[%s6 + $0x10] sm:$0xff]
    %v168 = vld [vmem:[%s6 + $0x18] sm:$0xff]
    %v169 = vld [vmem:[%s7] sm:$0x1]
    %v171 = vlaneseq
    %v172 = vshrl.u32 %v171, 7
    %v173 = vsub.s32 0, %v172
    %v174 = vrot.slane %v169, %v173
    %vm176 = vcmask 261120
    %v178 = vsel %vm176, %v163, 0
    %v181 = vsel %vm176, %v164, 0
    %183 = vmatprep.subr.mxu0 0.0
    %184 = vmatpush1.msra.mxu0 0.0
    %185 = vmatprep.subr.mxu0 0.0
    %186 = vmatpush1.msra.mxu0 0.0
    %187 = vmatprep.subr.mxu0 0.0
    %188 = vmatpush1.msra.mxu0 0.0
    %189 = vmatprep.subr.mxu0 0.0
    %190 = vmatpush1.msra.mxu0 0.0
    %191 = vmatprep.subr.mxu0 0.0
    %192 = vmatpush1.msra.mxu0 0.0
    %193 = vmatprep.subr.mxu0 0.0
    %194 = vmatpush1.msra.mxu0 0.0
    %195 = vmatprep.subr.mxu0 0.0
    %196 = vmatpush1.msra.mxu0 0.0
    %197 = vmatprep.subr.mxu0 0.0
    %198 = vmatpush1.msra.mxu0 0.0
    %199 = vmatprep.subr.mxu0 0.0
    %200 = vmatpush1.msra.mxu0 0.0
    %201 = vmatprep.subr.mxu0 0.0
    %202 = vmatpush1.msra.mxu0 0.0
    %203 = vmatprep.subr.mxu0 0.0
    %204 = vmatpush1.msra.mxu0 0.0
    %205 = vmatprep.subr.mxu0 0.0
    %206 = vmatpush1.msra.mxu0 0.0
    %207 = vmatprep.subr.mxu0 0.0
    %208 = vmatpush1.msra.mxu0 %v168
    %209 = vmatprep.subr.mxu0 0.0
    %210 = vmatpush1.msra.mxu0 %v167
    %211 = vmatprep.subr.mxu0 0.0
    %212 = vmatpush1.msra.mxu0 %v166
    %213 = vmatprep.subr.mxu0 0.0
    %214 = vmatpush1.msra.mxu0 %v165
    %215 = vmatprep.subr.mxu0 0.0
    %216 = vmatpush2.msra.mxu0 0.0
    %217 = vmatprep.subr.mxu0 0.0
    %218 = vmatpush2.msra.mxu0 0.0
    %219 = vmatprep.subr.mxu0 0.0
    %220 = vmatpush2.msra.mxu0 0.0
    %221 = vmatprep.subr.mxu0 0.0
    %222 = vmatpush2.msra.mxu0 0.0
    %223 = vmatprep.subr.mxu0 0.0
    %224 = vmatpush2.msra.mxu0 0.0
    %225 = vmatprep.subr.mxu0 0.0
    %226 = vmatpush2.msra.mxu0 0.0
    %227 = vmatprep.subr.mxu0 0.0
    %228 = vmatpush2.msra.mxu0 0.0
    %229 = vmatprep.subr.mxu0 0.0
    %230 = vmatpush2.msra.mxu0 0.0
    %231 = vmatprep.subr.mxu0 0.0
    %232 = vmatpush2.msra.mxu0 0.0
    %233 = vmatprep.subr.mxu0 0.0
    %234 = vmatpush2.msra.mxu0 0.0
    %235 = vmatprep.subr.mxu0 0.0
    %236 = vmatpush2.msra.mxu0 0.0
    %237 = vmatprep.subr.mxu0 0.0
    %238 = vmatpush2.msra.mxu0 0.0
    %239 = vmatprep.subr.mxu0 0.0
    %240 = vmatpush2.msra.mxu0 0.0
    %241 = vmatprep.subr.mxu0 0.0
    %242 = vmatpush2.msra.mxu0 0.0
    %243 = vmatprep.subr.mxu0 0.0
    %244 = vmatpush2.msra.mxu0 0.0
    %245 = vmatprep.subr.mxu0 0.0
    %246 = vmatpush2.msra.mxu0 0.0
    %247 = vmatprep.mubr.f32.mxu0 0.0
    %248 = vmatmul.mubr.f32.gmra.mxu0 %v178
    %v249 = vpop.f32.mrf.mxu0
    %v250 = vadd.f32 %v174, %v249
    %v251 = vpop.f32.mrf.mxu0
    %252 = vmatprep.mubr.f32.mxu0 0.0
    %253 = vmatmul.mubr.f32.gmra.mxu0 %v181
    %v254 = vpop.f32.mrf.mxu0
    %v255 = vadd.f32 %v174, %v254
    %v256 = vpop.f32.mrf.mxu0
    %257 = vdwg.mxu0
    %v258 = vmax.f32 %v250, 0.0
    %v259 = vmax.f32 %v255, 0.0
    %v260 = vld [vmem:[%s1] sm:$0xff]
    %v261 = vld [vmem:[%s8] sm:$0xff]
    %v262 = vld [vmem:[%s8 + $0x8] sm:$0xff]
    %v263 = vld [vmem:[%s8 + $0x10] sm:$0xff]
    %v264 = vld [vmem:[%s9] sm:$0x1]
    %v266 = vlaneseq
    %v267 = vshrl.u32 %v266, 7
    %v268 = vsub.s32 0, %v267
    %v269 = vrot.slane %v264, %v268
    %vm271 = vcmask 195584
    %v273 = vsel %vm271, %v260, 0
    %275 = vmatprep.subr.mxu0 0.0
    %276 = vmatpush1.msra.mxu0 0.0
    %277 = vmatprep.subr.mxu0 0.0
    %278 = vmatpush1.msra.mxu0 0.0
    %279 = vmatprep.subr.mxu0 0.0
    %280 = vmatpush1.msra.mxu0 0.0
    %281 = vmatprep.subr.mxu0 0.0
    %282 = vmatpush1.msra.mxu0 0.0
    %283 = vmatprep.subr.mxu0 0.0
    %284 = vmatpush1.msra.mxu0 0.0
    %285 = vmatprep.subr.mxu0 0.0
    %286 = vmatpush1.msra.mxu0 0.0
    %287 = vmatprep.subr.mxu0 0.0
    %288 = vmatpush1.msra.mxu0 0.0
    %289 = vmatprep.subr.mxu0 0.0
    %290 = vmatpush1.msra.mxu0 0.0
    %291 = vmatprep.subr.mxu0 0.0
    %292 = vmatpush1.msra.mxu0 0.0
    %293 = vmatprep.subr.mxu0 0.0
    %294 = vmatpush1.msra.mxu0 0.0
    %295 = vmatprep.subr.mxu0 0.0
    %296 = vmatpush1.msra.mxu0 0.0
    %297 = vmatprep.subr.mxu0 0.0
    %298 = vmatpush1.msra.mxu0 0.0
    %299 = vmatprep.subr.mxu0 0.0
    %300 = vmatpush1.msra.mxu0 0.0
    %301 = vmatprep.subr.mxu0 0.0
    %302 = vmatpush1.msra.mxu0 %v263
    %303 = vmatprep.subr.mxu0 0.0
    %304 = vmatpush1.msra.mxu0 %v262
    %305 = vmatprep.subr.mxu0 0.0
    %306 = vmatpush1.msra.mxu0 %v261
    %307 = vmatprep.subr.mxu0 0.0
    %308 = vmatpush2.msra.mxu0 0.0
    %309 = vmatprep.subr.mxu0 0.0
    %310 = vmatpush2.msra.mxu0 0.0
    %311 = vmatprep.subr.mxu0 0.0
    %312 = vmatpush2.msra.mxu0 0.0
    %313 = vmatprep.subr.mxu0 0.0
    %314 = vmatpush2.msra.mxu0 0.0
    %315 = vmatprep.subr.mxu0 0.0
    %316 = vmatpush2.msra.mxu0 0.0
    %317 = vmatprep.subr.mxu0 0.0
    %318 = vmatpush2.msra.mxu0 0.0
    %319 = vmatprep.subr.mxu0 0.0
    %320 = vmatpush2.msra.mxu0 0.0
    %321 = vmatprep.subr.mxu0 0.0
    %322 = vmatpush2.msra.mxu0 0.0
    %323 = vmatprep.subr.mxu0 0.0
    %324 = vmatpush2.msra.mxu0 0.0
    %325 = vmatprep.subr.mxu0 0.0
    %326 = vmatpush2.msra.mxu0 0.0
    %327 = vmatprep.subr.mxu0 0.0
    %328 = vmatpush2.msra.mxu0 0.0
    %329 = vmatprep.subr.mxu0 0.0
    %330 = vmatpush2.msra.mxu0 0.0
    %331 = vmatprep.subr.mxu0 0.0
    %332 = vmatpush2.msra.mxu0 0.0
    %333 = vmatprep.subr.mxu0 0.0
    %334 = vmatpush2.msra.mxu0 0.0
    %335 = vmatprep.subr.mxu0 0.0
    %336 = vmatpush2.msra.mxu0 0.0
    %337 = vmatprep.subr.mxu0 0.0
    %338 = vmatpush2.msra.mxu0 0.0
    %339 = vmatprep.mubr.f32.mxu0 0.0
    %340 = vmatmul.mubr.f32.gmra.mxu0 %v273
    %v341 = vpop.f32.mrf.mxu0
    %v342 = vadd.f32 %v269, %v341
    %v343 = vpop.f32.mrf.mxu0
    %344 = vdwg.mxu0
    %v345 = vmax.f32 %v342, 0.0
    %v346 = vld [vmem:[%s10] sm:$0xff]
    %v347 = vld [vmem:[%s10 + $0x8] sm:$0xff]
    %v348 = vld [vmem:[%s10 + $0x10] sm:$0xff]
    %v349 = vld [vmem:[%s10 + $0x18] sm:$0xff]
    %v350 = vld [vmem:[%s11] sm:$0x1]
    %v352 = vlaneseq
    %v353 = vshrl.u32 %v352, 7
    %v354 = vsub.s32 0, %v353
    %v355 = vrot.slane %v350, %v354
    %v358 = vsel %vm176, %v345, 0
    %360 = vmatprep.subr.mxu0 0.0
    %361 = vmatpush1.msra.mxu0 0.0
    %362 = vmatprep.subr.mxu0 0.0
    %363 = vmatpush1.msra.mxu0 0.0
    %364 = vmatprep.subr.mxu0 0.0
    %365 = vmatpush1.msra.mxu0 0.0
    %366 = vmatprep.subr.mxu0 0.0
    %367 = vmatpush1.msra.mxu0 0.0
    %368 = vmatprep.subr.mxu0 0.0
    %369 = vmatpush1.msra.mxu0 0.0
    %370 = vmatprep.subr.mxu0 0.0
    %371 = vmatpush1.msra.mxu0 0.0
    %372 = vmatprep.subr.mxu0 0.0
    %373 = vmatpush1.msra.mxu0 0.0
    %374 = vmatprep.subr.mxu0 0.0
    %375 = vmatpush1.msra.mxu0 0.0
    %376 = vmatprep.subr.mxu0 0.0
    %377 = vmatpush1.msra.mxu0 0.0
    %378 = vmatprep.subr.mxu0 0.0
    %379 = vmatpush1.msra.mxu0 0.0
    %380 = vmatprep.subr.mxu0 0.0
    %381 = vmatpush1.msra.mxu0 0.0
    %382 = vmatprep.subr.mxu0 0.0
    %383 = vmatpush1.msra.mxu0 0.0
    %384 = vmatprep.subr.mxu0 0.0
    %385 = vmatpush1.msra.mxu0 %v349
    %386 = vmatprep.subr.mxu0 0.0
    %387 = vmatpush1.msra.mxu0 %v348
    %388 = vmatprep.subr.mxu0 0.0
    %389 = vmatpush1.msra.mxu0 %v347
    %390 = vmatprep.subr.mxu0 0.0
    %391 = vmatpush1.msra.mxu0 %v346
    %392 = vmatprep.subr.mxu0 0.0
    %393 = vmatpush2.msra.mxu0 0.0
    %394 = vmatprep.subr.mxu0 0.0
    %395 = vmatpush2.msra.mxu0 0.0
    %396 = vmatprep.subr.mxu0 0.0
    %397 = vmatpush2.msra.mxu0 0.0
    %398 = vmatprep.subr.mxu0 0.0
    %399 = vmatpush2.msra.mxu0 0.0
    %400 = vmatprep.subr.mxu0 0.0
    %401 = vmatpush2.msra.mxu0 0.0
    %402 = vmatprep.subr.mxu0 0.0
    %403 = vmatpush2.msra.mxu0 0.0
    %404 = vmatprep.subr.mxu0 0.0
    %405 = vmatpush2.msra.mxu0 0.0
    %406 = vmatprep.subr.mxu0 0.0
    %407 = vmatpush2.msra.mxu0 0.0
    %408 = vmatprep.subr.mxu0 0.0
    %409 = vmatpush2.msra.mxu0 0.0
    %410 = vmatprep.subr.mxu0 0.0
    %411 = vmatpush2.msra.mxu0 0.0
    %412 = vmatprep.subr.mxu0 0.0
    %413 = vmatpush2.msra.mxu0 0.0
    %414 = vmatprep.subr.mxu0 0.0
    %415 = vmatpush2.msra.mxu0 0.0
    %416 = vmatprep.subr.mxu0 0.0
    %417 = vmatpush2.msra.mxu0 0.0
    %418 = vmatprep.subr.mxu0 0.0
    %419 = vmatpush2.msra.mxu0 0.0
    %420 = vmatprep.subr.mxu0 0.0
    %421 = vmatpush2.msra.mxu0 0.0
    %422 = vmatprep.subr.mxu0 0.0
    %423 = vmatpush2.msra.mxu0 0.0
    %424 = vmatprep.mubr.f32.mxu0 0.0
    %425 = vmatmul.mubr.f32.gmra.mxu0 %v358
    %v426 = vpop.f32.mrf.mxu0
    %v427 = vadd.f32 %v355, %v426
    %v428 = vpop.f32.mrf.mxu0
    %429 = vdwg.mxu0
    %v430 = vmax.f32 %v427, 0.0
    %v431 = vld [vmem:[%s2] sm:$0xff]
    %v432 = vld [vmem:[%s12] sm:$0xff]
    %v433 = vld [vmem:[%s12 + $0x8] sm:$0xff]
    %v434 = vld [vmem:[%s12 + $0x10] sm:$0xff]
    %v435 = vld [vmem:[%s13] sm:$0x1]
    %v437 = vlaneseq
    %v438 = vshrl.u32 %v437, 7
    %v439 = vsub.s32 0, %v438
    %v440 = vrot.slane %v435, %v439
    %v443 = vsel %vm271, %v431, 0
    %445 = vmatprep.subr.mxu0 0.0
    %446 = vmatpush1.msra.mxu0 0.0
    %447 = vmatprep.subr.mxu0 0.0
    %448 = vmatpush1.msra.mxu0 0.0
    %449 = vmatprep.subr.mxu0 0.0
    %450 = vmatpush1.msra.mxu0 0.0
    %451 = vmatprep.subr.mxu0 0.0
    %452 = vmatpush1.msra.mxu0 0.0
    %453 = vmatprep.subr.mxu0 0.0
    %454 = vmatpush1.msra.mxu0 0.0
    %455 = vmatprep.subr.mxu0 0.0
    %456 = vmatpush1.msra.mxu0 0.0
    %457 = vmatprep.subr.mxu0 0.0
    %458 = vmatpush1.msra.mxu0 0.0
    %459 = vmatprep.subr.mxu0 0.0
    %460 = vmatpush1.msra.mxu0 0.0
    %461 = vmatprep.subr.mxu0 0.0
    %462 = vmatpush1.msra.mxu0 0.0
    %463 = vmatprep.subr.mxu0 0.0
    %464 = vmatpush1.msra.mxu0 0.0
    %465 = vmatprep.subr.mxu0 0.0
    %466 = vmatpush1.msra.mxu0 0.0
    %467 = vmatprep.subr.mxu0 0.0
    %468 = vmatpush1.msra.mxu0 0.0
    %469 = vmatprep.subr.mxu0 0.0
    %470 = vmatpush1.msra.mxu0 0.0
    %471 = vmatprep.subr.mxu0 0.0
    %472 = vmatpush1.msra.mxu0 %v434
    %473 = vmatprep.subr.mxu0 0.0
    %474 = vmatpush1.msra.mxu0 %v433
    %475 = vmatprep.subr.mxu0 0.0
    %476 = vmatpush1.msra.mxu0 %v432
    %477 = vmatprep.subr.mxu0 0.0
    %478 = vmatpush2.msra.mxu0 0.0
    %479 = vmatprep.subr.mxu0 0.0
    %480 = vmatpush2.msra.mxu0 0.0
    %481 = vmatprep.subr.mxu0 0.0
    %482 = vmatpush2.msra.mxu0 0.0
    %483 = vmatprep.subr.mxu0 0.0
    %484 = vmatpush2.msra.mxu0 0.0
    %485 = vmatprep.subr.mxu0 0.0
    %486 = vmatpush2.msra.mxu0 0.0
    %487 = vmatprep.subr.mxu0 0.0
    %488 = vmatpush2.msra.mxu0 0.0
    %489 = vmatprep.subr.mxu0 0.0
    %490 = vmatpush2.msra.mxu0 0.0
    %491 = vmatprep.subr.mxu0 0.0
    %492 = vmatpush2.msra.mxu0 0.0
    %493 = vmatprep.subr.mxu0 0.0
    %494 = vmatpush2.msra.mxu0 0.0
    %495 = vmatprep.subr.mxu0 0.0
    %496 = vmatpush2.msra.mxu0 0.0
    %497 = vmatprep.subr.mxu0 0.0
    %498 = vmatpush2.msra.mxu0 0.0
    %499 = vmatprep.subr.mxu0 0.0
    %500 = vmatpush2.msra.mxu0 0.0
    %501 = vmatprep.subr.mxu0 0.0
    %502 = vmatpush2.msra.mxu0 0.0
    %503 = vmatprep.subr.mxu0 0.0
    %504 = vmatpush2.msra.mxu0 0.0
    %505 = vmatprep.subr.mxu0 0.0
    %506 = vmatpush2.msra.mxu0 0.0
    %507 = vmatprep.subr.mxu0 0.0
    %508 = vmatpush2.msra.mxu0 0.0
    %509 = vmatprep.mubr.f32.mxu0 0.0
    %510 = vmatmul.mubr.f32.gmra.mxu0 %v443
    %v511 = vpop.f32.mrf.mxu0
    %v512 = vadd.f32 %v440, %v511
    %v513 = vpop.f32.mrf.mxu0
    %514 = vdwg.mxu0
    %v515 = vmax.f32 %v512, 0.0
    %v516 = vld [vmem:[%s14] sm:$0xff]
    %v517 = vld [vmem:[%s14 + $0x8] sm:$0xff]
    %v518 = vld [vmem:[%s14 + $0x10] sm:$0xff]
    %v519 = vld [vmem:[%s14 + $0x18] sm:$0xff]
    %v520 = vld [vmem:[%s15] sm:$0x1]
    %v522 = vlaneseq
    %v523 = vshrl.u32 %v522, 7
    %v524 = vsub.s32 0, %v523
    %v525 = vrot.slane %v520, %v524
    %v528 = vsel %vm176, %v515, 0
    %530 = vmatprep.subr.mxu0 0.0
    %531 = vmatpush1.msra.mxu0 0.0
    %532 = vmatprep.subr.mxu0 0.0
    %533 = vmatpush1.msra.mxu0 0.0
    %534 = vmatprep.subr.mxu0 0.0
    %535 = vmatpush1.msra.mxu0 0.0
    %536 = vmatprep.subr.mxu0 0.0
    %537 = vmatpush1.msra.mxu0 0.0
    %538 = vmatprep.subr.mxu0 0.0
    %539 = vmatpush1.msra.mxu0 0.0
    %540 = vmatprep.subr.mxu0 0.0
    %541 = vmatpush1.msra.mxu0 0.0
    %542 = vmatprep.subr.mxu0 0.0
    %543 = vmatpush1.msra.mxu0 0.0
    %544 = vmatprep.subr.mxu0 0.0
    %545 = vmatpush1.msra.mxu0 0.0
    %546 = vmatprep.subr.mxu0 0.0
    %547 = vmatpush1.msra.mxu0 0.0
    %548 = vmatprep.subr.mxu0 0.0
    %549 = vmatpush1.msra.mxu0 0.0
    %550 = vmatprep.subr.mxu0 0.0
    %551 = vmatpush1.msra.mxu0 0.0
    %552 = vmatprep.subr.mxu0 0.0
    %553 = vmatpush1.msra.mxu0 0.0
    %554 = vmatprep.subr.mxu0 0.0
    %555 = vmatpush1.msra.mxu0 %v519
    %556 = vmatprep.subr.mxu0 0.0
    %557 = vmatpush1.msra.mxu0 %v518
    %558 = vmatprep.subr.mxu0 0.0
    %559 = vmatpush1.msra.mxu0 %v517
    %560 = vmatprep.subr.mxu0 0.0
    %561 = vmatpush1.msra.mxu0 %v516
    %562 = vmatprep.subr.mxu0 0.0
    %563 = vmatpush2.msra.mxu0 0.0
    %564 = vmatprep.subr.mxu0 0.0
    %565 = vmatpush2.msra.mxu0 0.0
    %566 = vmatprep.subr.mxu0 0.0
    %567 = vmatpush2.msra.mxu0 0.0
    %568 = vmatprep.subr.mxu0 0.0
    %569 = vmatpush2.msra.mxu0 0.0
    %570 = vmatprep.subr.mxu0 0.0
    %571 = vmatpush2.msra.mxu0 0.0
    %572 = vmatprep.subr.mxu0 0.0
    %573 = vmatpush2.msra.mxu0 0.0
    %574 = vmatprep.subr.mxu0 0.0
    %575 = vmatpush2.msra.mxu0 0.0
    %576 = vmatprep.subr.mxu0 0.0
    %577 = vmatpush2.msra.mxu0 0.0
    %578 = vmatprep.subr.mxu0 0.0
    %579 = vmatpush2.msra.mxu0 0.0
    %580 = vmatprep.subr.mxu0 0.0
    %581 = vmatpush2.msra.mxu0 0.0
    %582 = vmatprep.subr.mxu0 0.0
    %583 = vmatpush2.msra.mxu0 0.0
    %584 = vmatprep.subr.mxu0 0.0
    %585 = vmatpush2.msra.mxu0 0.0
    %586 = vmatprep.subr.mxu0 0.0
    %587 = vmatpush2.msra.mxu0 0.0
    %588 = vmatprep.subr.mxu0 0.0
    %589 = vmatpush2.msra.mxu0 0.0
    %590 = vmatprep.subr.mxu0 0.0
    %591 = vmatpush2.msra.mxu0 0.0
    %592 = vmatprep.subr.mxu0 0.0
    %593 = vmatpush2.msra.mxu0 0.0
    %594 = vmatprep.mubr.f32.mxu0 0.0
    %595 = vmatmul.mubr.f32.gmra.mxu0 %v528
    %v596 = vpop.f32.mrf.mxu0
    %v597 = vadd.f32 %v525, %v596
    %v598 = vpop.f32.mrf.mxu0
    %599 = vdwg.mxu0
    %v600 = vmax.f32 %v597, 0.0
    %601 = vst.msk [vmem:[#allocation2] sm:$0xff] %vm81, %v430
    %602 = vst.msk [vmem:[#allocation2 + $0x8] sm:$0xff] %vm81, %v600
    %605 = vrot.lane.b32.xlu0 %v258, 16
    %v606 = vpop.permute.xlu0 %605
    %607 = vrot.lane.b32.xlu0 %v259, 16
    %v608 = vpop.permute.xlu0 %607
    %vm611 = vcmask 261248
    %612 = vst.msk [vmem:[#allocation2] sm:$0xff] %vm611, %v606
    %613 = vst.msk [vmem:[#allocation2 + $0x8] sm:$0xff] %vm611, %v608
    %v614 = vld [vmem:[%s3] sm:$0xff]
    %v615 = vld [vmem:[%s3 + $0x8] sm:$0xff]
    %v616 = vsel %vm81, %v614, 0.0
    %617 = vadd.xlane.f32.xlu0 %v616
    %v618 = vpop.xlane.xlu0 %617
    %v619 = vsel %vm81, %v615, 0.0
    %620 = vadd.xlane.f32.xlu0 %v619
    %v621 = vpop.xlane.xlu0 %620
    %v622 = vmax.f32 %v618, 1.0
    %v623 = vmax.f32 %v621, 1.0
    %v624 = vrsqrt.pop %v622
    %v625 = vrsqrt.pop %v623
    %v626 = vld [vmem:[%s16] sm:$0xff]
    %v627 = vld [vmem:[%s16 + $0x8] sm:$0xff]
    %v628 = vld [vmem:[%s16 + $0x10] sm:$0xff]
    %v629 = vld [vmem:[%s16 + $0x18] sm:$0xff]
    %v630 = vsel %vm81, %v258, 0
    %v632 = vsel %vm81, %v259, 0
    %634 = vmatprep.subr.mxu0 0.0
    %635 = vmatpush1.msra.mxu0 0.0
    %636 = vmatprep.subr.mxu0 0.0
    %637 = vmatpush1.msra.mxu0 0.0
    %638 = vmatprep.subr.mxu0 0.0
    %639 = vmatpush1.msra.mxu0 0.0
    %640 = vmatprep.subr.mxu0 0.0
    %641 = vmatpush1.msra.mxu0 0.0
    %642 = vmatprep.subr.mxu0 0.0
    %643 = vmatpush1.msra.mxu0 0.0
    %644 = vmatprep.subr.mxu0 0.0
    %645 = vmatpush1.msra.mxu0 0.0
    %646 = vmatprep.subr.mxu0 0.0
    %647 = vmatpush1.msra.mxu0 0.0
    %648 = vmatprep.subr.mxu0 0.0
    %649 = vmatpush1.msra.mxu0 0.0
    %650 = vmatprep.subr.mxu0 0.0
    %651 = vmatpush1.msra.mxu0 0.0
    %652 = vmatprep.subr.mxu0 0.0
    %653 = vmatpush1.msra.mxu0 0.0
    %654 = vmatprep.subr.mxu0 0.0
    %655 = vmatpush1.msra.mxu0 0.0
    %656 = vmatprep.subr.mxu0 0.0
    %657 = vmatpush1.msra.mxu0 0.0
    %658 = vmatprep.subr.mxu0 0.0
    %659 = vmatpush1.msra.mxu0 0.0
    %660 = vmatprep.subr.mxu0 0.0
    %661 = vmatpush1.msra.mxu0 0.0
    %662 = vmatprep.subr.mxu0 0.0
    %663 = vmatpush1.msra.mxu0 %v629
    %664 = vmatprep.subr.mxu0 0.0
    %665 = vmatpush1.msra.mxu0 %v628
    %666 = vmatprep.subr.mxu0 0.0
    %667 = vmatpush2.msra.mxu0 0.0
    %668 = vmatprep.subr.mxu0 0.0
    %669 = vmatpush2.msra.mxu0 0.0
    %670 = vmatprep.subr.mxu0 0.0
    %671 = vmatpush2.msra.mxu0 0.0
    %672 = vmatprep.subr.mxu0 0.0
    %673 = vmatpush2.msra.mxu0 0.0
    %674 = vmatprep.subr.mxu0 0.0
    %675 = vmatpush2.msra.mxu0 0.0
    %676 = vmatprep.subr.mxu0 0.0
    %677 = vmatpush2.msra.mxu0 0.0
    %678 = vmatprep.subr.mxu0 0.0
    %679 = vmatpush2.msra.mxu0 0.0
    %680 = vmatprep.subr.mxu0 0.0
    %681 = vmatpush2.msra.mxu0 0.0
    %682 = vmatprep.subr.mxu0 0.0
    %683 = vmatpush2.msra.mxu0 0.0
    %684 = vmatprep.subr.mxu0 0.0
    %685 = vmatpush2.msra.mxu0 0.0
    %686 = vmatprep.subr.mxu0 0.0
    %687 = vmatpush2.msra.mxu0 0.0
    %688 = vmatprep.subr.mxu0 0.0
    %689 = vmatpush2.msra.mxu0 0.0
    %690 = vmatprep.subr.mxu0 0.0
    %691 = vmatpush2.msra.mxu0 0.0
    %692 = vmatprep.subr.mxu0 0.0
    %693 = vmatpush2.msra.mxu0 0.0
    %694 = vmatprep.subr.mxu0 0.0
    %695 = vmatpush2.msra.mxu0 0.0
    %696 = vmatprep.subr.mxu0 0.0
    %697 = vmatpush2.msra.mxu0 0.0
    %698 = vmatprep.mubr.f32.mxu0 0.0
    %699 = vmatmul.mubr.f32.gmra.mxu0 %v630
    %v700 = vpop.f32.mrf.mxu0
    %v701 = vadd.f32 0.0, %v700
    %v702 = vpop.f32.mrf.mxu0
    %703 = vmatprep.mubr.f32.mxu0 0.0
    %704 = vmatmul.mubr.f32.gmra.mxu0 %v632
    %v705 = vpop.f32.mrf.mxu0
    %v706 = vadd.f32 0.0, %v705
    %v707 = vpop.f32.mrf.mxu0
    %708 = vdwg.mxu0
    %v710 = vsel %vm81, %v430, 0
    %v713 = vsel %vm81, %v600, 0
    %715 = vmatprep.subr.mxu0 0.0
    %716 = vmatpush1.msra.mxu0 0.0
    %717 = vmatprep.subr.mxu0 0.0
    %718 = vmatpush1.msra.mxu0 0.0
    %719 = vmatprep.subr.mxu0 0.0
    %720 = vmatpush1.msra.mxu0 0.0
    %721 = vmatprep.subr.mxu0 0.0
    %722 = vmatpush1.msra.mxu0 0.0
    %723 = vmatprep.subr.mxu0 0.0
    %724 = vmatpush1.msra.mxu0 0.0
    %725 = vmatprep.subr.mxu0 0.0
    %726 = vmatpush1.msra.mxu0 0.0
    %727 = vmatprep.subr.mxu0 0.0
    %728 = vmatpush1.msra.mxu0 0.0
    %729 = vmatprep.subr.mxu0 0.0
    %730 = vmatpush1.msra.mxu0 0.0
    %731 = vmatprep.subr.mxu0 0.0
    %732 = vmatpush1.msra.mxu0 0.0
    %733 = vmatprep.subr.mxu0 0.0
    %734 = vmatpush1.msra.mxu0 0.0
    %735 = vmatprep.subr.mxu0 0.0
    %736 = vmatpush1.msra.mxu0 0.0
    %737 = vmatprep.subr.mxu0 0.0
    %738 = vmatpush1.msra.mxu0 0.0
    %739 = vmatprep.subr.mxu0 0.0
    %740 = vmatpush1.msra.mxu0 0.0
    %741 = vmatprep.subr.mxu0 0.0
    %742 = vmatpush1.msra.mxu0 0.0
    %743 = vmatprep.subr.mxu0 0.0
    %744 = vmatpush1.msra.mxu0 %v627
    %745 = vmatprep.subr.mxu0 0.0
    %746 = vmatpush1.msra.mxu0 %v626
    %747 = vmatprep.subr.mxu0 0.0
    %748 = vmatpush2.msra.mxu0 0.0
    %749 = vmatprep.subr.mxu0 0.0
    %750 = vmatpush2.msra.mxu0 0.0
    %751 = vmatprep.subr.mxu0 0.0
    %752 = vmatpush2.msra.mxu0 0.0
    %753 = vmatprep.subr.mxu0 0.0
    %754 = vmatpush2.msra.mxu0 0.0
    %755 = vmatprep.subr.mxu0 0.0
    %756 = vmatpush2.msra.mxu0 0.0
    %757 = vmatprep.subr.mxu0 0.0
    %758 = vmatpush2.msra.mxu0 0.0
    %759 = vmatprep.subr.mxu0 0.0
    %760 = vmatpush2.msra.mxu0 0.0
    %761 = vmatprep.subr.mxu0 0.0
    %762 = vmatpush2.msra.mxu0 0.0
    %763 = vmatprep.subr.mxu0 0.0
    %764 = vmatpush2.msra.mxu0 0.0
    %765 = vmatprep.subr.mxu0 0.0
    %766 = vmatpush2.msra.mxu0 0.0
    %767 = vmatprep.subr.mxu0 0.0
    %768 = vmatpush2.msra.mxu0 0.0
    %769 = vmatprep.subr.mxu0 0.0
    %770 = vmatpush2.msra.mxu0 0.0
    %771 = vmatprep.subr.mxu0 0.0
    %772 = vmatpush2.msra.mxu0 0.0
    %773 = vmatprep.subr.mxu0 0.0
    %774 = vmatpush2.msra.mxu0 0.0
    %775 = vmatprep.subr.mxu0 0.0
    %776 = vmatpush2.msra.mxu0 0.0
    %777 = vmatprep.subr.mxu0 0.0
    %778 = vmatpush2.msra.mxu0 0.0
    %779 = vmatprep.mubr.f32.mxu0 0.0
    %780 = vmatmul.mubr.f32.gmra.mxu0 %v710
    %v781 = vpop.f32.mrf.mxu0
    %v782 = vadd.f32 %v701, %v781
    %v783 = vpop.f32.mrf.mxu0
    %784 = vmatprep.mubr.f32.mxu0 0.0
    %785 = vmatmul.mubr.f32.gmra.mxu0 %v713
    %v786 = vpop.f32.mrf.mxu0
    %v787 = vadd.f32 %v706, %v786
    %v788 = vpop.f32.mrf.mxu0
    %789 = vdwg.mxu0
    %v790 = vmul.f32 %v624, %v782
    %v791 = vmul.f32 %v625, %v787
    %v793 = vsel %vm81, %v614, 0
    %v796 = vsel %vm81, %v615, 0
    %798 = vmatprep.subr.mxu0 0.0
    %799 = vmatpush1.msra.mxu0 0.0
    %800 = vmatprep.subr.mxu0 0.0
    %801 = vmatpush1.msra.mxu0 0.0
    %802 = vmatprep.subr.mxu0 0.0
    %803 = vmatpush1.msra.mxu0 0.0
    %804 = vmatprep.subr.mxu0 0.0
    %805 = vmatpush1.msra.mxu0 0.0
    %806 = vmatprep.subr.mxu0 0.0
    %807 = vmatpush1.msra.mxu0 0.0
    %808 = vmatprep.subr.mxu0 0.0
    %809 = vmatpush1.msra.mxu0 0.0
    %810 = vmatprep.subr.mxu0 0.0
    %811 = vmatpush1.msra.mxu0 0.0
    %812 = vmatprep.subr.mxu0 0.0
    %813 = vmatpush1.msra.mxu0 0.0
    %814 = vmatprep.subr.mxu0 0.0
    %815 = vmatpush1.msra.mxu0 0.0
    %816 = vmatprep.subr.mxu0 0.0
    %817 = vmatpush1.msra.mxu0 0.0
    %818 = vmatprep.subr.mxu0 0.0
    %819 = vmatpush1.msra.mxu0 0.0
    %820 = vmatprep.subr.mxu0 0.0
    %821 = vmatpush1.msra.mxu0 0.0
    %822 = vmatprep.subr.mxu0 0.0
    %823 = vmatpush1.msra.mxu0 0.0
    %824 = vmatprep.subr.mxu0 0.0
    %825 = vmatpush1.msra.mxu0 0.0
    %826 = vmatprep.subr.mxu0 0.0
    %827 = vmatpush1.msra.mxu0 %v791
    %828 = vmatprep.subr.mxu0 0.0
    %829 = vmatpush1.msra.mxu0 %v790
    %830 = vmatprep.subr.mxu0 0.0
    %831 = vmatpush2.msra.mxu0 0.0
    %832 = vmatprep.subr.mxu0 0.0
    %833 = vmatpush2.msra.mxu0 0.0
    %834 = vmatprep.subr.mxu0 0.0
    %835 = vmatpush2.msra.mxu0 0.0
    %836 = vmatprep.subr.mxu0 0.0
    %837 = vmatpush2.msra.mxu0 0.0
    %838 = vmatprep.subr.mxu0 0.0
    %839 = vmatpush2.msra.mxu0 0.0
    %840 = vmatprep.subr.mxu0 0.0
    %841 = vmatpush2.msra.mxu0 0.0
    %842 = vmatprep.subr.mxu0 0.0
    %843 = vmatpush2.msra.mxu0 0.0
    %844 = vmatprep.subr.mxu0 0.0
    %845 = vmatpush2.msra.mxu0 0.0
    %846 = vmatprep.subr.mxu0 0.0
    %847 = vmatpush2.msra.mxu0 0.0
    %848 = vmatprep.subr.mxu0 0.0
    %849 = vmatpush2.msra.mxu0 0.0
    %850 = vmatprep.subr.mxu0 0.0
    %851 = vmatpush2.msra.mxu0 0.0
    %852 = vmatprep.subr.mxu0 0.0
    %853 = vmatpush2.msra.mxu0 0.0
    %854 = vmatprep.subr.mxu0 0.0
    %855 = vmatpush2.msra.mxu0 0.0
    %856 = vmatprep.subr.mxu0 0.0
    %857 = vmatpush2.msra.mxu0 0.0
    %858 = vmatprep.subr.mxu0 0.0
    %859 = vmatpush2.msra.mxu0 0.0
    %860 = vmatprep.subr.mxu0 0.0
    %861 = vmatpush2.msra.mxu0 0.0
    %862 = vmatprep.mubr.f32.mxu0 0.0
    %863 = vmatmul.mubr.f32.gmra.mxu0 %v793
    %v864 = vpop.f32.mrf.mxu0
    %v865 = vadd.f32 0.0, %v864
    %v866 = vpop.f32.mrf.mxu0
    %867 = vmatprep.mubr.f32.mxu0 0.0
    %868 = vmatmul.mubr.f32.gmra.mxu0 %v796
    %v869 = vpop.f32.mrf.mxu0
    %v870 = vadd.f32 0.0, %v869
    %v871 = vpop.f32.mrf.mxu0
    %872 = vdwg.mxu0
    %v873 = vmul.f32 %v624, %v865
    %v874 = vmul.f32 %v625, %v870
    %v875 = vld [vmem:[%s17] sm:$0x1]
    %v877 = vlaneseq
    %v878 = vshrl.u32 %v877, 7
    %v879 = vsub.s32 0, %v878
    %v880 = vrot.slane %v875, %v879
    %v882 = vadd.f32 %v873, %v880
    %v883 = vadd.f32 %v874, %v880
    %v884 = vmax.f32 %v882, 0.0
    %v885 = vmax.f32 %v883, 0.0
    %886 = vst.msk [vmem:[#allocation4] sm:$0xff] %vm176, %v884
    %887 = vst.msk [vmem:[#allocation4 + $0x8] sm:$0xff] %vm176, %v885
    %v888 = vld [vmem:[%s18] sm:$0xff]
    %v889 = vld [vmem:[%s18 + $0x8] sm:$0xff]
    %v890 = vld [vmem:[%s18 + $0x10] sm:$0xff]
    %v891 = vld [vmem:[%s18 + $0x18] sm:$0xff]
    %v893 = vsel %vm176, %v884, 0
    %v896 = vsel %vm176, %v885, 0
    %898 = vmatprep.subr.mxu0 0.0
    %899 = vmatpush1.msra.mxu0 0.0
    %900 = vmatprep.subr.mxu0 0.0
    %901 = vmatpush1.msra.mxu0 0.0
    %902 = vmatprep.subr.mxu0 0.0
    %903 = vmatpush1.msra.mxu0 0.0
    %904 = vmatprep.subr.mxu0 0.0
    %905 = vmatpush1.msra.mxu0 0.0
    %906 = vmatprep.subr.mxu0 0.0
    %907 = vmatpush1.msra.mxu0 0.0
    %908 = vmatprep.subr.mxu0 0.0
    %909 = vmatpush1.msra.mxu0 0.0
    %910 = vmatprep.subr.mxu0 0.0
    %911 = vmatpush1.msra.mxu0 0.0
    %912 = vmatprep.subr.mxu0 0.0
    %913 = vmatpush1.msra.mxu0 0.0
    %914 = vmatprep.subr.mxu0 0.0
    %915 = vmatpush1.msra.mxu0 0.0
    %916 = vmatprep.subr.mxu0 0.0
    %917 = vmatpush1.msra.mxu0 0.0
    %918 = vmatprep.subr.mxu0 0.0
    %919 = vmatpush1.msra.mxu0 0.0
    %920 = vmatprep.subr.mxu0 0.0
    %921 = vmatpush1.msra.mxu0 0.0
    %922 = vmatprep.subr.mxu0 0.0
    %923 = vmatpush1.msra.mxu0 %v891
    %924 = vmatprep.subr.mxu0 0.0
    %925 = vmatpush1.msra.mxu0 %v890
    %926 = vmatprep.subr.mxu0 0.0
    %927 = vmatpush1.msra.mxu0 %v889
    %928 = vmatprep.subr.mxu0 0.0
    %929 = vmatpush1.msra.mxu0 %v888
    %930 = vmatprep.subr.mxu0 0.0
    %931 = vmatpush2.msra.mxu0 0.0
    %932 = vmatprep.subr.mxu0 0.0
    %933 = vmatpush2.msra.mxu0 0.0
    %934 = vmatprep.subr.mxu0 0.0
    %935 = vmatpush2.msra.mxu0 0.0
    %936 = vmatprep.subr.mxu0 0.0
    %937 = vmatpush2.msra.mxu0 0.0
    %938 = vmatprep.subr.mxu0 0.0
    %939 = vmatpush2.msra.mxu0 0.0
    %940 = vmatprep.subr.mxu0 0.0
    %941 = vmatpush2.msra.mxu0 0.0
    %942 = vmatprep.subr.mxu0 0.0
    %943 = vmatpush2.msra.mxu0 0.0
    %944 = vmatprep.subr.mxu0 0.0
    %945 = vmatpush2.msra.mxu0 0.0
    %946 = vmatprep.subr.mxu0 0.0
    %947 = vmatpush2.msra.mxu0 0.0
    %948 = vmatprep.subr.mxu0 0.0
    %949 = vmatpush2.msra.mxu0 0.0
    %950 = vmatprep.subr.mxu0 0.0
    %951 = vmatpush2.msra.mxu0 0.0
    %952 = vmatprep.subr.mxu0 0.0
    %953 = vmatpush2.msra.mxu0 0.0
    %954 = vmatprep.subr.mxu0 0.0
    %955 = vmatpush2.msra.mxu0 0.0
    %956 = vmatprep.subr.mxu0 0.0
    %957 = vmatpush2.msra.mxu0 0.0
    %958 = vmatprep.subr.mxu0 0.0
    %959 = vmatpush2.msra.mxu0 0.0
    %960 = vmatprep.subr.mxu0 0.0
    %961 = vmatpush2.msra.mxu0 0.0
    %962 = vmatprep.mubr.f32.mxu0 0.0
    %963 = vmatmul.mubr.f32.gmra.mxu0 %v893
    %v964 = vpop.f32.mrf.mxu0
    %v965 = vadd.f32 0.0, %v964
    %v966 = vpop.f32.mrf.mxu0
    %967 = vmatprep.mubr.f32.mxu0 0.0
    %968 = vmatmul.mubr.f32.gmra.mxu0 %v896
    %v969 = vpop.f32.mrf.mxu0
    %v970 = vadd.f32 0.0, %v969
    %v971 = vpop.f32.mrf.mxu0
    %972 = vdwg.mxu0
    %v973 = vmul.f32 %v624, %v965
    %v974 = vmul.f32 %v625, %v970
    %975 = vmatprep.subr.mxu0 0.0
    %976 = vmatpush1.msra.mxu0 0.0
    %977 = vmatprep.subr.mxu0 0.0
    %978 = vmatpush1.msra.mxu0 0.0
    %979 = vmatprep.subr.mxu0 0.0
    %980 = vmatpush1.msra.mxu0 0.0
    %981 = vmatprep.subr.mxu0 0.0
    %982 = vmatpush1.msra.mxu0 0.0
    %983 = vmatprep.subr.mxu0 0.0
    %984 = vmatpush1.msra.mxu0 0.0
    %985 = vmatprep.subr.mxu0 0.0
    %986 = vmatpush1.msra.mxu0 0.0
    %987 = vmatprep.subr.mxu0 0.0
    %988 = vmatpush1.msra.mxu0 0.0
    %989 = vmatprep.subr.mxu0 0.0
    %990 = vmatpush1.msra.mxu0 0.0
    %991 = vmatprep.subr.mxu0 0.0
    %992 = vmatpush1.msra.mxu0 0.0
    %993 = vmatprep.subr.mxu0 0.0
    %994 = vmatpush1.msra.mxu0 0.0
    %995 = vmatprep.subr.mxu0 0.0
    %996 = vmatpush1.msra.mxu0 0.0
    %997 = vmatprep.subr.mxu0 0.0
    %998 = vmatpush1.msra.mxu0 0.0
    %999 = vmatprep.subr.mxu0 0.0
    %1000 = vmatpush1.msra.mxu0 0.0
    %1001 = vmatprep.subr.mxu0 0.0
    %1002 = vmatpush1.msra.mxu0 0.0
    %1003 = vmatprep.subr.mxu0 0.0
    %1004 = vmatpush1.msra.mxu0 %v974
    %1005 = vmatprep.subr.mxu0 0.0
    %1006 = vmatpush1.msra.mxu0 %v973
    %1007 = vmatprep.subr.mxu0 0.0
    %1008 = vmatpush2.msra.mxu0 0.0
    %1009 = vmatprep.subr.mxu0 0.0
    %1010 = vmatpush2.msra.mxu0 0.0
    %1011 = vmatprep.subr.mxu0 0.0
    %1012 = vmatpush2.msra.mxu0 0.0
    %1013 = vmatprep.subr.mxu0 0.0
    %1014 = vmatpush2.msra.mxu0 0.0
    %1015 = vmatprep.subr.mxu0 0.0
    %1016 = vmatpush2.msra.mxu0 0.0
    %1017 = vmatprep.subr.mxu0 0.0
    %1018 = vmatpush2.msra.mxu0 0.0
    %1019 = vmatprep.subr.mxu0 0.0
    %1020 = vmatpush2.msra.mxu0 0.0
    %1021 = vmatprep.subr.mxu0 0.0
    %1022 = vmatpush2.msra.mxu0 0.0
    %1023 = vmatprep.subr.mxu0 0.0
    %1024 = vmatpush2.msra.mxu0 0.0
    %1025 = vmatprep.subr.mxu0 0.0
    %1026 = vmatpush2.msra.mxu0 0.0
    %1027 = vmatprep.subr.mxu0 0.0
    %1028 = vmatpush2.msra.mxu0 0.0
    %1029 = vmatprep.subr.mxu0 0.0
    %1030 = vmatpush2.msra.mxu0 0.0
    %1031 = vmatprep.subr.mxu0 0.0
    %1032 = vmatpush2.msra.mxu0 0.0
    %1033 = vmatprep.subr.mxu0 0.0
    %1034 = vmatpush2.msra.mxu0 0.0
    %1035 = vmatprep.subr.mxu0 0.0
    %1036 = vmatpush2.msra.mxu0 0.0
    %1037 = vmatprep.subr.mxu0 0.0
    %1038 = vmatpush2.msra.mxu0 0.0
    %1039 = vmatprep.mubr.f32.mxu0 0.0
    %1040 = vmatmul.mubr.f32.gmra.mxu0 %v793
    %v1041 = vpop.f32.mrf.mxu0
    %v1042 = vadd.f32 0.0, %v1041
    %v1043 = vpop.f32.mrf.mxu0
    %1044 = vmatprep.mubr.f32.mxu0 0.0
    %1045 = vmatmul.mubr.f32.gmra.mxu0 %v796
    %v1046 = vpop.f32.mrf.mxu0
    %v1047 = vadd.f32 0.0, %v1046
    %v1048 = vpop.f32.mrf.mxu0
    %1049 = vdwg.mxu0
    %v1050 = vmul.f32 %v624, %v1042
    %v1051 = vmul.f32 %v625, %v1047
    %v1052 = vld [vmem:[%s19] sm:$0x1]
    %v1054 = vlaneseq
    %v1055 = vshrl.u32 %v1054, 7
    %v1056 = vsub.s32 0, %v1055
    %v1057 = vrot.slane %v1052, %v1056
    %v1059 = vadd.f32 %v1050, %v1057
    %v1060 = vadd.f32 %v1051, %v1057
    %v1061 = vmax.f32 %v1059, 0.0
    %v1062 = vmax.f32 %v1060, 0.0
    %1063 = vst.msk [vmem:[#allocation6] sm:$0xff] %vm81, %v1061
    %1064 = vst.msk [vmem:[#allocation6 + $0x8] sm:$0xff] %vm81, %v1062
    // Predicated region
    $region82: #{tpu_custom_call.1} parent=1 // pred_check
      _
    $region83: #{tpu_custom_call.1} parent=1 // pred_check_branch
      %1066 = sbr.rel (0) target = $region85
    $region84: #{tpu_custom_call.1} parent=1 // pred_region
      %s1068 = ssub.s32 256, 256
      %1069 = vsyncadd [#allocation3], %s1068
      %s1070 = sshll.u32 [#allocation2], 4
      %s1071 = int_to_ptr.vmem [resolvable:$true] %s1070
      %1076 = dma.vmem_to_hbm [thread:$0]  %s1071, 256, %s20, [#allocation3], 128, 128, 8
    $region85: #{tpu_custom_call.1} parent=1 // pred_fallthru
      _
    // Predicated region
    $region86: #{tpu_custom_call.1} parent=1 // pred_check
      _
    $region87: #{tpu_custom_call.1} parent=1 // pred_check_branch
      %1078 = sbr.rel (0) target = $region89
    $region88: #{tpu_custom_call.1} parent=1 // pred_region
      %s1080 = ssub.s32 256, 256
      %1081 = vsyncadd [#allocation5], %s1080
      %s1082 = sshll.u32 [#allocation4], 4
      %s1083 = int_to_ptr.vmem [resolvable:$true] %s1082
      %1088 = dma.vmem_to_hbm [thread:$0]  %s1083, 256, %s21, [#allocation5], 128, 128, 8
    $region89: #{tpu_custom_call.1} parent=1 // pred_fallthru
      _
    // Predicated region
    $region90: #{tpu_custom_call.1} parent=1 // pred_check
      _
    $region91: #{tpu_custom_call.1} parent=1 // pred_check_branch
      %1090 = sbr.rel (0) target = $region93
    $region92: #{tpu_custom_call.1} parent=1 // pred_region
      %s1092 = ssub.s32 256, 256
      %1093 = vsyncadd [#allocation5], %s1092
      %s1094 = sshll.u32 [#allocation6], 4
      %s1095 = int_to_ptr.vmem [resolvable:$true] %s1094
      %1100 = dma.vmem_to_hbm [thread:$0]  %s1095, 256, %s22, [#allocation5], 128, 128, 8
    $region93: #{tpu_custom_call.1} parent=1 // pred_fallthru
      _
    // Predicated region
    $region94: #{tpu_custom_call.1} parent=1 // pred_check
      _
    $region95: #{tpu_custom_call.1} parent=1 // pred_check_branch
      %1102 = sbr.rel (0) target = $region97
    $region96: #{tpu_custom_call.1} parent=1 // pred_region
      %1103 = dma.done [#allocation3], 256
    $region97: #{tpu_custom_call.1} parent=1 // pred_fallthru
      _
    // Predicated region
    $region98: #{tpu_custom_call.1} parent=1 // pred_check
      _
    $region99: #{tpu_custom_call.1} parent=1 // pred_check_branch
      %1105 = sbr.rel (0) target = $region101
    $region100: #{tpu_custom_call.1} parent=1 // pred_region
      %1106 = dma.done [#allocation5], 256
    $region101: #{tpu_custom_call.1} parent=1 // pred_fallthru
      _
    // Predicated region
    $region102: #{tpu_custom_call.1} parent=1 // pred_check
      _
    $region103: #{tpu_custom_call.1} parent=1 // pred_check_branch
      %1108 = sbr.rel (0) target = $region105
    $region104: #{tpu_custom_call.1} parent=1 // pred_region
      %1109 = dma.done [#allocation5], 256
    $region105: #{tpu_custom_call.1} parent=1 // pred_fallthru
      _
    %1110 = vsyncpa [#allocation3], 1
    %1111 = vsyncpa [#allocation5], 1

</llo_original>
